<compile_context>
chip_gen: v7x
topology: tpu7x:2x2x1
jax: 0.10.0
libtpu: 0.0.40
codegen_flags: <defaults>
</compile_context>

<pallas_src>
import functools

import jax
import jax.numpy as jnp
from jax.experimental import pallas as pl
from jax.experimental.pallas import tpu as pltpu


def _sq_frob_kernel(a_ref, b_ref, o_ref, acc_ref):
    # Grid: (P shards, steps). acc_ref is a full-tile (TILE_R, C) f32 scratch.
    i = pl.program_id(1)

    @pl.when(i == 0)
    def _():
        acc_ref[...] = jnp.zeros_like(acc_ref)

    # Steady state: pure VPU elementwise work (no cross-lane/XLU ops).
    d = a_ref[...].astype(jnp.float32) - b_ref[...].astype(jnp.float32)
    acc_ref[...] += d * d  # |x|**2 == x*x for real inputs

    @pl.when(i == pl.num_programs(1) - 1)
    def _():
        # One reduce per shard: fold row groups of 8 (vreg-tile adds) so the
        # output block stays (8, C) lane-dense and unmasked.
        tile_r, c = acc_ref.shape
        o_ref[...] = jnp.sum(acc_ref[...].reshape(tile_r // 8, 8, c), axis=0)


def squared_frobenius_loss(a, b, loss_weight=1.0):
    assert a.shape == b.shape, "a and b must have the same shape"
    assert a.ndim >= 2
    # d*d == |d|^2 only for real dtypes (matches torch.abs(a-b)**2 for reals).
    assert not jnp.issubdtype(a.dtype, jnp.complexfloating), (
        "complex inputs not supported by this kernel"
    )

    M, N = a.shape[-2], a.shape[-1]
    B = 1
    for s in a.shape[:-2]:
        B *= s
    total = B * M * N

    # --- choose a lane-dense tiling, decoupled from (M, N) ------------------
    C = 512 if total >= 512 else 128                 # lanes: multiple of 128
    rows = -(-total // C)                            # ceil(total / C)
    TILE_R = min(1024, max(8, -(-rows // 8) * 8))    # sublane-aligned, <= 1024
    num_tiles = -(-rows // TILE_R)                   # row tiles needed
    P = 2 if num_tiles >= 2 else 1                   # shards (megacore on v7x)
    num_tiles = -(-num_tiles // P) * P               # round tiles up to P
    steps = num_tiles // P
    rows_padded = num_tiles * TILE_R
    padded_total = rows_padded * C

    # --- flatten + zero-pad to a (rows_padded, C) slab ----------------------
    a_flat = a.reshape(-1)
    b_flat = b.reshape(-1)
    pad = padded_total - total
    if pad:
        a_flat = jnp.pad(a_flat, (0, pad))
        b_flat = jnp.pad(b_flat, (0, pad))
    a2 = a_flat.reshape(rows_padded, C)
    b2 = b_flat.reshape(rows_padded, C)

    itemsize = jnp.dtype(a.dtype).itemsize

    partials = pl.pallas_call(
        _sq_frob_kernel,
        out_shape=jax.ShapeDtypeStruct((P * 8, C), jnp.float32),
        grid_spec=pltpu.PrefetchScalarGridSpec(
            num_scalar_prefetch=0,
            grid=(P, steps),
            in_specs=[
                pl.BlockSpec((TILE_R, C), lambda p, i: (p * steps + i, 0)),
                pl.BlockSpec((TILE_R, C), lambda p, i: (p * steps + i, 0)),
            ],
            # One lane-dense (8, C) partial-sum block per shard, written only
            # at that shard's finalize step.
            out_specs=pl.BlockSpec((8, C), lambda p, i: (p, 0)),
            scratch_shapes=[pltpu.VMEM((TILE_R, C), jnp.float32)],
        ),
        compiler_params=pltpu.CompilerParams(
            dimension_semantics=("parallel", "arbitrary"),
            vmem_limit_bytes=32 * 1024 * 1024,
        ),
        cost_estimate=pl.CostEstimate(
            flops=3 * padded_total,
            transcendentals=0,
            bytes_accessed=2 * padded_total * itemsize + P * 8 * C * 4,
        ),
    )(a2, b2)

    # Tiny final reduce over per-shard lane partials, then mean + weight.
    scale = float(loss_weight) / float(B)
    return jnp.sum(partials) * scale


def _reference(a, b, loss_weight=1.0):
    loss = jnp.sum(
        jnp.abs(a.astype(jnp.float32) - b.astype(jnp.float32)) ** 2,
        axis=(-2, -1),
    )
    return loss_weight * jnp.mean(loss)


if __name__ == "__main__":
    key = jax.random.PRNGKey(0)
    k1, k2 = jax.random.split(key)

    # Small shapes consistent with the module: (batch=2, channels=4, 16x16 maps).
    shape = (2, 4, 16, 16)
    a = jax.random.normal(k1, shape, dtype=jnp.float32)
    b = jax.random.normal(k2, shape, dtype=jnp.float32)
    loss_weight = 1.0

    out = jax.block_until_ready(squared_frobenius_loss(a, b, loss_weight))
    ref = jax.block_until_ready(_reference(a, b, loss_weight))
    assert jnp.allclose(out, ref, rtol=1e-5, atol=1e-5), (out, ref)

    print("KERNEL_OK")
</pallas_src>

<mosaic_0001>
module attributes {stable_mosaic.version = 11 : i64} {
  func.func @_sq_frob_kernel(%arg0: i32, %arg1: i32, %arg2: memref<8x512xf32, #tpu.memory_space<vmem>>, %arg3: memref<8x512xf32, #tpu.memory_space<vmem>>, %arg4: memref<8x512xf32, #tpu.memory_space<vmem>>, %arg5: memref<8x512xf32, #tpu.memory_space<vmem>>) attributes {dimension_semantics = [#tpu.dimension_semantics<parallel>, #tpu.dimension_semantics<arbitrary>], iteration_bounds = array<i64: 1, 1>, scalar_prefetch = 0 : i64, scratch_operands = 1 : i64, tpu.core_type = #tpu.core_type<tc>, window_params = [{transform_indices = @transform_0, window_bounds = array<i64: 8, 512>}, {transform_indices = @transform_1, window_bounds = array<i64: 8, 512>}, {transform_indices = @transform_2, window_bounds = array<i64: 8, 512>}]} {
    %c0_i32 = arith.constant 0 : i32
    %0 = arith.cmpi eq, %arg1, %c0_i32 : i32
    %1 = arith.extui %0 : i1 to i32
    %c0_i32_0 = arith.constant 0 : i32
    %2 = arith.cmpi ne, %1, %c0_i32_0 : i32
    scf.if %2 {
      %cst = arith.constant 0.000000e+00 : f32
      %13 = vector.broadcast %cst : f32 to vector<8x512xf32>
      %c0_10 = arith.constant 0 : index
      %c0_11 = arith.constant 0 : index
      %14 = vector.load %arg5[%c0_10, %c0_11] : memref<8x512xf32, #tpu.memory_space<vmem>>, vector<8x512xf32>
      tpu.vector_store %arg5[%c0_10, %c0_11], %13 {strides = array<i32>} : memref<8x512xf32, #tpu.memory_space<vmem>>, vector<8x512xf32>,
    } else {
    }
    %c0 = arith.constant 0 : index
    %c0_1 = arith.constant 0 : index
    %3 = vector.load %arg2[%c0, %c0_1] : memref<8x512xf32, #tpu.memory_space<vmem>>, vector<8x512xf32>
    %c0_2 = arith.constant 0 : index
    %c0_3 = arith.constant 0 : index
    %4 = vector.load %arg3[%c0_2, %c0_3] : memref<8x512xf32, #tpu.memory_space<vmem>>, vector<8x512xf32>
    %5 = arith.subf %3, %4 : vector<8x512xf32>
    %c0_4 = arith.constant 0 : index
    %c0_5 = arith.constant 0 : index
    %6 = vector.load %arg5[%c0_4, %c0_5] : memref<8x512xf32, #tpu.memory_space<vmem>>, vector<8x512xf32>
    %7 = arith.mulf %5, %5 : vector<8x512xf32>
    %8 = arith.addf %6, %7 : vector<8x512xf32>
    %c0_6 = arith.constant 0 : index
    %c0_7 = arith.constant 0 : index
    %9 = vector.load %arg5[%c0_6, %c0_7] : memref<8x512xf32, #tpu.memory_space<vmem>>, vector<8x512xf32>
    tpu.vector_store %arg5[%c0_6, %c0_7], %8 {strides = array<i32>} : memref<8x512xf32, #tpu.memory_space<vmem>>, vector<8x512xf32>,
    %c0_i32_8 = arith.constant 0 : i32
    %10 = arith.cmpi eq, %arg1, %c0_i32_8 : i32
    %11 = arith.extui %10 : i1 to i32
    %c0_i32_9 = arith.constant 0 : i32
    %12 = arith.cmpi ne, %11, %c0_i32_9 : i32
    scf.if %12 {
      %c0_10 = arith.constant 0 : index
      %c0_11 = arith.constant 0 : index
      %13 = vector.load %arg5[%c0_10, %c0_11] : memref<8x512xf32, #tpu.memory_space<vmem>>, vector<8x512xf32>
      %14 = vector.shape_cast %13 : vector<8x512xf32> to vector<1x8x512xf32>
      %cst = arith.constant dense<0.000000e+00> : vector<8x512xf32>
      %15 = vector.multi_reduction <add>, %14, %cst [0] : vector<1x8x512xf32> to vector<8x512xf32>
      %c0_12 = arith.constant 0 : index
      %c0_13 = arith.constant 0 : index
      %16 = vector.load %arg4[%c0_12, %c0_13] : memref<8x512xf32, #tpu.memory_space<vmem>>, vector<8x512xf32>
      tpu.vector_store %arg4[%c0_12, %c0_13], %15 {strides = array<i32>} : memref<8x512xf32, #tpu.memory_space<vmem>>, vector<8x512xf32>,
    } else {
    }
    return
  }
  func.func @transform_0(%arg0: i32, %arg1: i32) -> (i32, i32) {
    %c1_i32 = arith.constant 1 : i32
    %0 = arith.muli %arg0, %c1_i32 : i32
    %1 = arith.addi %0, %arg1 : i32
    %c0_i32 = arith.constant 0 : i32
    %c0_i32_0 = arith.constant 0 : i32
    return %1, %c0_i32 : i32, i32
  }
  func.func @transform_1(%arg0: i32, %arg1: i32) -> (i32, i32) {
    %c1_i32 = arith.constant 1 : i32
    %0 = arith.muli %arg0, %c1_i32 : i32
    %1 = arith.addi %0, %arg1 : i32
    %c0_i32 = arith.constant 0 : i32
    %c0_i32_0 = arith.constant 0 : i32
    return %1, %c0_i32 : i32, i32
  }
  func.func @transform_2(%arg0: i32, %arg1: i32) -> (i32, i32) {
    %c0_i32 = arith.constant 0 : i32
    %c0_i32_0 = arith.constant 0 : i32
    return %arg0, %c0_i32 : i32, i32
  }
}

</mosaic_0001>

<llo_original>
// kernel: tpu_custom_call.1
$region0: #{tpu_custom_call.1}
  #allocation0 [shape = 'u32[]', space=smem, size = 0x4, offset = 0x4, fixed_abs, tag = 'smem constant byte address 0x4 - core index']
  #allocation1 [shape = 'u32[144,128]{1,0:T(1,128)}', space=vmem, size = 0x12000, scoped, tag = 'internal scratch']
  #allocation2 [shape = 'f32[8,512]{1,0:T(8,128)}', space=vmem, size = 0x4000, scoped, tag = 'scratch operand']
  %s0 = inlined_call_operand.hbm [shape: f32[8,512], index: 0, kind: input, shape index: {}]
  %s1 = inlined_call_operand.hbm [shape: f32[8,512], index: 1, kind: input, shape index: {}]
  %s2 = inlined_call_operand.hbm [shape: f32[8,512], index: 2, kind: output, shape index: {}]
  %s3 = sld [smem:[#allocation0]]
  $region34: #{tpu_custom_call.1} parent=0
    _
  %s5 = ssub.s32 1, %s3
  %s6 = scalar_select 0, %s5, %s3
  $region1: #{tpu_custom_call.1} parent=0
    #allocation3 [shape = 'u8[16384]{0}', space=vmem, size = 0x4000, scoped, tag = 'input window, operand 0, single buffered']
    #allocation4 [shape = 's32[1]{0}', space=sflag, size = 0x4, scoped, tag = 'scoped memory for tpu_custom_call.1']
    #allocation5 [shape = 's32[1]{0}', space=sflag, size = 0x4, scoped, tag = 'scoped memory for tpu_custom_call.1']
    #allocation6 [shape = 'u8[16384]{0}', space=vmem, size = 0x4000, scoped, tag = 'input window, operand 1, single buffered']
    #allocation7 [shape = 's32[1]{0}', space=sflag, size = 0x4, scoped, tag = 'scoped memory for tpu_custom_call.1']
    #allocation8 [shape = 'u8[16384]{0}', space=vmem, size = 0x4000, scoped, tag = 'output window, operand 0, single buffered']
    %7 = vsyncpa [#allocation4], 0
    %8 = vsyncpa [#allocation7], 0
    %9 = vsyncpa [#allocation5], 0
    // Predicated region
    $region2: #{tpu_custom_call.1} parent=1 // pred_check
      _
    $region3: #{tpu_custom_call.1} parent=1 // pred_check_branch
      %11 = sbr.rel (0) target = $region5
    $region4: #{tpu_custom_call.1} parent=1 // pred_region
      %s12 = sadd.s32 0, 0
      %s14 = ssub.s32 512, 512
      %15 = vsyncadd [#allocation4], %s14
      %s16 = smul.addr %s12, 4
      %s17 = smul.addr %s16, 128
      %s18 = scalar_lea.hbm %s0, %s17
      %s20 = sshll.u32 [#allocation3], 4
      %s21 = int_to_ptr.vmem [resolvable:$true] %s20
      %23 = dma.hbm_to_vmem [thread:$0]  %s18, 512, %s21, [#allocation4]
    $region5: #{tpu_custom_call.1} parent=1 // pred_fallthru
      _
    // Predicated region
    $region6: #{tpu_custom_call.1} parent=1 // pred_check
      _
    $region7: #{tpu_custom_call.1} parent=1 // pred_check_branch
      %25 = sbr.rel (0) target = $region9
    $region8: #{tpu_custom_call.1} parent=1 // pred_region
      %s26 = sadd.s32 0, 0
      %s28 = ssub.s32 512, 512
      %29 = vsyncadd [#allocation7], %s28
      %s30 = smul.addr %s26, 4
      %s31 = smul.addr %s30, 128
      %s32 = scalar_lea.hbm %s1, %s31
      %s34 = sshll.u32 [#allocation6], 4
      %s35 = int_to_ptr.vmem [resolvable:$true] %s34
      %37 = dma.hbm_to_vmem [thread:$0]  %s32, 512, %s35, [#allocation7]
    $region9: #{tpu_custom_call.1} parent=1 // pred_fallthru
      _
    // Predicated region
    $region10: #{tpu_custom_call.1} parent=1 // pred_check
      _
    $region11: #{tpu_custom_call.1} parent=1 // pred_check_branch
      %39 = sbr.rel (0) target = $region13
    $region12: #{tpu_custom_call.1} parent=1 // pred_region
      %40 = dma.done [#allocation4], 512
    $region13: #{tpu_custom_call.1} parent=1 // pred_fallthru
      _
    // Predicated region
    $region14: #{tpu_custom_call.1} parent=1 // pred_check
      _
    $region15: #{tpu_custom_call.1} parent=1 // pred_check_branch
      %42 = sbr.rel (0) target = $region17
    $region16: #{tpu_custom_call.1} parent=1 // pred_region
      %43 = dma.done [#allocation7], 512
    $region17: #{tpu_custom_call.1} parent=1 // pred_fallthru
      _
    %s44 = sadd.s32 0, 0
    %s45 = sadd.s32 0, 0
    %p46 = scmp.eq.s32.totalorder 0, 0
    // Predicated region
    $region18: #{tpu_custom_call.1} parent=1 // pred_check
      %p47 = pneg %p46
    $region19: #{tpu_custom_call.1} parent=1 // pred_check_branch
      %49 = sbr.rel (%p47) target = $region21
    $region20: #{tpu_custom_call.1} parent=1 // pred_region
      %50 = vst [vmem:[#allocation2] sm:$0xff] 0.0
      %51 = vst [vmem:[#allocation2 + $0x8] sm:$0xff] 0.0
      %52 = vst [vmem:[#allocation2 + $0x10] sm:$0xff] 0.0
      %53 = vst [vmem:[#allocation2 + $0x18] sm:$0xff] 0.0
    $region21: #{tpu_custom_call.1} parent=1 // pred_fallthru
      _
    %v54 = vld [vmem:[#allocation3] sm:$0xff]
    %v55 = vld [vmem:[#allocation3 + $0x8] sm:$0xff]
    %v56 = vld [vmem:[#allocation3 + $0x10] sm:$0xff]
    %v57 = vld [vmem:[#allocation3 + $0x18] sm:$0xff]
    %v58 = vld [vmem:[#allocation6] sm:$0xff]
    %v59 = vld [vmem:[#allocation6 + $0x8] sm:$0xff]
    %v60 = vld [vmem:[#allocation6 + $0x10] sm:$0xff]
    %v61 = vld [vmem:[#allocation6 + $0x18] sm:$0xff]
    %v62 = vsub.f32 %v54, %v58
    %v63 = vsub.f32 %v55, %v59
    %v64 = vsub.f32 %v56, %v60
    %v65 = vsub.f32 %v57, %v61
    %v66 = vld [vmem:[#allocation2] sm:$0xff]
    %v67 = vld [vmem:[#allocation2 + $0x8] sm:$0xff]
    %v68 = vld [vmem:[#allocation2 + $0x10] sm:$0xff]
    %v69 = vld [vmem:[#allocation2 + $0x18] sm:$0xff]
    %v70 = vmul.f32 %v62, %v62
    %v71 = vmul.f32 %v63, %v63
    %v72 = vmul.f32 %v64, %v64
    %v73 = vmul.f32 %v65, %v65
    %v74 = vadd.f32 %v66, %v70
    %v75 = vadd.f32 %v67, %v71
    %v76 = vadd.f32 %v68, %v72
    %v77 = vadd.f32 %v69, %v73
    %78 = vst [vmem:[#allocation2] sm:$0xff] %v74
    %79 = vst [vmem:[#allocation2 + $0x8] sm:$0xff] %v75
    %80 = vst [vmem:[#allocation2 + $0x10] sm:$0xff] %v76
    %81 = vst [vmem:[#allocation2 + $0x18] sm:$0xff] %v77
    // Predicated region
    $region22: #{tpu_custom_call.1} parent=1 // pred_check
      %p82 = pneg %p46
    $region23: #{tpu_custom_call.1} parent=1 // pred_check_branch
      %84 = sbr.rel (%p82) target = $region25
    $region24: #{tpu_custom_call.1} parent=1 // pred_region
      %v85 = vld [vmem:[#allocation2] sm:$0xff]
      %v86 = vld [vmem:[#allocation2 + $0x8] sm:$0xff]
      %v87 = vld [vmem:[#allocation2 + $0x10] sm:$0xff]
      %v88 = vld [vmem:[#allocation2 + $0x18] sm:$0xff]
      %v89 = vadd.f32 %v85, 0.0
      %v90 = vadd.f32 %v86, 0.0
      %v91 = vadd.f32 %v87, 0.0
      %v92 = vadd.f32 %v88, 0.0
      %93 = vst [vmem:[#allocation8] sm:$0xff] %v89
      %94 = vst [vmem:[#allocation8 + $0x8] sm:$0xff] %v90
      %95 = vst [vmem:[#allocation8 + $0x10] sm:$0xff] %v91
      %96 = vst [vmem:[#allocation8 + $0x18] sm:$0xff] %v92
    $region25: #{tpu_custom_call.1} parent=1 // pred_fallthru
      _
    // Predicated region
    $region26: #{tpu_custom_call.1} parent=1 // pred_check
      _
    $region27: #{tpu_custom_call.1} parent=1 // pred_check_branch
      %98 = sbr.rel (0) target = $region29
    $region28: #{tpu_custom_call.1} parent=1 // pred_region
      %s100 = ssub.s32 512, 512
      %101 = vsyncadd [#allocation5], %s100
      %s103 = sshll.u32 [#allocation8], 4
      %s104 = int_to_ptr.vmem [resolvable:$true] %s103
      %106 = dma.vmem_to_hbm [thread:$0]  %s104, 512, %s2, [#allocation5]
    $region29: #{tpu_custom_call.1} parent=1 // pred_fallthru
      _
    // Predicated region
    $region30: #{tpu_custom_call.1} parent=1 // pred_check
      _
    $region31: #{tpu_custom_call.1} parent=1 // pred_check_branch
      %108 = sbr.rel (0) target = $region33
    $region32: #{tpu_custom_call.1} parent=1 // pred_region
      %109 = dma.done [#allocation5], 512
    $region33: #{tpu_custom_call.1} parent=1 // pred_fallthru
      _
    %110 = vsyncpa [#allocation4], 1
    %111 = vsyncpa [#allocation7], 1
    %112 = vsyncpa [#allocation5], 1

</llo_original>
